<compile_context>
chip_gen: v7x
topology: tpu7x:2x2x1
jax: 0.10.0
libtpu: 0.0.40
codegen_flags: <defaults>
</compile_context>

<pallas_src>
import functools

import jax
import jax.numpy as jnp
from jax.experimental import pallas as pl
from jax.experimental.pallas import tpu as pltpu


def _round_up(x: int, m: int) -> int:
    return ((x + m - 1) // m) * m


def _maxpool_kernel(x_ref, o_ref, *, seq_len, seq_tile, fill):
    # x_ref: (bb, ts, th) VMEM tile, o_ref: (bb, th) resident accumulator tile.
    s = pl.program_id(2)  # innermost (reduction) grid axis
    x = x_ref[...]

    if seq_len % seq_tile != 0:
        # Ragged S tail: the boundary block reads garbage rows past S; mask them
        # so they never win the max.  (B / H tails need no masking: their
        # garbage only reaches out-of-bounds output rows/lanes, which Pallas
        # drops on write-back.)
        row = jax.lax.broadcasted_iota(jnp.int32, x.shape, 1)
        x = jnp.where(s * seq_tile + row < seq_len, x, jnp.array(fill, x.dtype))

    tile_max = jnp.max(x, axis=1)  # (bb, th) sublane reduce of one tile

    @pl.when(s == 0)
    def _init():
        o_ref[...] = tile_max

    @pl.when(s != 0)
    def _accumulate():
        o_ref[...] = jnp.maximum(o_ref[...], tile_max)


def max_pool(x: jax.Array) -> jax.Array:
    """Equivalent of torch.max(x, dim=1)[0]."""
    if x.dtype == jnp.bool_:
        # torch.max supports bool; route through int8 (max over {0,1} is exact).
        return max_pool(x.astype(jnp.int8)).astype(jnp.bool_)

    if x.ndim < 2:
        raise ValueError("max_pool expects at least 2 dims (reduction over dim=1)")

    orig_shape = x.shape
    B, S = orig_shape[0], orig_shape[1]
    rest = orig_shape[2:]
    H = 1
    for d in rest:
        H *= d
    x3 = x.reshape(B, S, H)  # collapse trailing dims into the lane axis

    dtype = x3.dtype
    itemsize = jnp.dtype(dtype).itemsize

    if jnp.issubdtype(dtype, jnp.floating):
        fill = float("-inf")
    else:
        fill = int(jnp.iinfo(dtype).min)

    # Sublane packing: 8 for 32-bit, 16 for bf16/fp16, 32 for int8/fp8.
    pack = max(8, 32 // itemsize)

    # ---- Lane (H) tile: multiple of 128 for unmasked, lane-dense stores.
    if H >= 128:
        th = min(512, (H // 128) * 128)
    else:
        # TODO(synk): for H < 128, fold batch into the lane dim for fully
        # lane-dense stores; full-H blocks are legal and the output is tiny.
        th = H

    # ---- Batch (sublane) tile.  Prefer splitting B (not H) across the two
    # v7x TensorCores when the H axis cannot be split.
    bb_cap = min(128, _round_up(B, pack))
    if B > pack and pl.cdiv(H, th) == 1:
        bb_cap = min(bb_cap, max(pack, _round_up((B + 1) // 2, pack)))
    bb = pack

    # If the parallel grid would still collapse to a single tile (tiny batch,
    # moderate H), split H so both v7x cores get work (no effect on v5e/v6e).
    if pl.cdiv(B, bb_cap) * pl.cdiv(H, th) < 2 and th >= 256:
        th //= 2  # still a multiple of 128

    # ---- Sequence tile: ~8 MiB per input block, sized jointly with bb when S
    # is short so per-block bytes stay near target and grid-step count stays low.
    target_bytes = 8 * 1024 * 1024
    ts = max(pack, (target_bytes // (bb * th * itemsize)) // pack * pack)
    ts_cap = _round_up(S, pack)
    if ts >= ts_cap:
        ts = ts_cap  # one S-tile covers the whole sequence; grow bb instead
        bb = min(
            bb_cap,
            max(pack, (target_bytes // (ts * th * itemsize)) // pack * pack),
        )

    grid = (pl.cdiv(B, bb), pl.cdiv(H, th), pl.cdiv(S, ts))

    # Explicit VMEM budget: double-buffered input + output blocks + slack,
    # kept under v7x's 64 MiB physical VMEM (v5e/v6e have 128 MiB).
    in_block_bytes = bb * ts * th * itemsize
    out_block_bytes = bb * th * itemsize
    vmem_limit = 2 * (in_block_bytes + out_block_bytes) + (4 << 20)
    vmem_limit = min(max(vmem_limit, 32 << 20), 56 << 20)

    kernel = functools.partial(_maxpool_kernel, seq_len=S, seq_tile=ts, fill=fill)

    out = pl.pallas_call(
        kernel,
        out_shape=jax.ShapeDtypeStruct((B, H), dtype),
        grid_spec=pltpu.PrefetchScalarGridSpec(
            num_scalar_prefetch=0,
            grid=grid,
            in_specs=[pl.BlockSpec((bb, ts, th), lambda b, h, s: (b, s, h))],
            out_specs=pl.BlockSpec((bb, th), lambda b, h, s: (b, h)),
        ),
        compiler_params=pltpu.CompilerParams(
            # Output block is revisited across the S axis (running max), so S
            # must be "arbitrary"; batch/H stay "parallel" for megacore sharding.
            dimension_semantics=("parallel", "parallel", "arbitrary"),
            vmem_limit_bytes=vmem_limit,
        ),
        cost_estimate=pl.CostEstimate(
            flops=B * S * H,
            transcendentals=0,
            bytes_accessed=B * S * H * itemsize + B * H * itemsize,
        ),
    )(x3)

    if rest == (H,):
        return out
    return out.reshape((B,) + rest)


if __name__ == "__main__":
    key = jax.random.PRNGKey(0)

    # Primary check: [batch=2, seq=8, hidden=32], matching the module's dim=1 reduce.
    B, S, H = 2, 8, 32
    x = jax.random.normal(key, (B, S, H), dtype=jnp.float32)
    out = jax.block_until_ready(max_pool(x))
    ref = jnp.max(x, axis=1)
    assert out.shape == (B, H), out.shape
    assert jnp.allclose(out, ref), "mismatch vs reference"

    # Ragged check: B not a multiple of the sublane tile, S not a multiple of the
    # sequence tile (exercises the in-kernel tail mask and dropped B-tail rows).
    B2, S2, H2 = 3, 13, 32
    x2 = jax.random.normal(jax.random.PRNGKey(1), (B2, S2, H2), dtype=jnp.float32)
    out2 = jax.block_until_ready(max_pool(x2))
    ref2 = jnp.max(x2, axis=1)
    assert out2.shape == (B2, H2), out2.shape
    assert jnp.allclose(out2, ref2), "mismatch vs reference (ragged case)"

    print("KERNEL_OK")
</pallas_src>

<mosaic_0001>
module attributes {stable_mosaic.version = 11 : i64} {
  func.func @_maxpool_kernel(%arg0: i32, %arg1: i32, %arg2: i32, %arg3: memref<8x8x32xf32, #tpu.memory_space<vmem>>, %arg4: memref<8x32xf32, #tpu.memory_space<vmem>>) attributes {dimension_semantics = [#tpu.dimension_semantics<parallel>, #tpu.dimension_semantics<parallel>, #tpu.dimension_semantics<arbitrary>], iteration_bounds = array<i64: 1, 1, 1>, scalar_prefetch = 0 : i64, scratch_operands = 0 : i64, tpu.core_type = #tpu.core_type<tc>, window_params = [{transform_indices = @transform_0, window_bounds = array<i64: 8, 8, 32>}, {transform_indices = @transform_1, window_bounds = array<i64: 8, 32>}]} {
    %c0 = arith.constant 0 : index
    %c0_0 = arith.constant 0 : index
    %c0_1 = arith.constant 0 : index
    %0 = vector.load %arg3[%c0, %c0_0, %c0_1] : memref<8x8x32xf32, #tpu.memory_space<vmem>>, vector<8x8x32xf32>
    %cst = arith.constant dense<0xFF800000> : vector<8x32xf32>
    %1 = vector.multi_reduction <maximumf>, %0, %cst [1] : vector<8x8x32xf32> to vector<8x32xf32>
    %c0_i32 = arith.constant 0 : i32
    %2 = arith.cmpi eq, %arg2, %c0_i32 : i32
    %3 = arith.extui %2 : i1 to i32
    %c0_i32_2 = arith.constant 0 : i32
    %4 = arith.cmpi ne, %3, %c0_i32_2 : i32
    scf.if %4 {
      %c0_5 = arith.constant 0 : index
      %c0_6 = arith.constant 0 : index
      %8 = vector.load %arg4[%c0_5, %c0_6] : memref<8x32xf32, #tpu.memory_space<vmem>>, vector<8x32xf32>
      tpu.vector_store %arg4[%c0_5, %c0_6], %1 {strides = array<i32>} : memref<8x32xf32, #tpu.memory_space<vmem>>, vector<8x32xf32>,
    } else {
    }
    %c0_i32_3 = arith.constant 0 : i32
    %5 = arith.cmpi ne, %arg2, %c0_i32_3 : i32
    %6 = arith.extui %5 : i1 to i32
    %c0_i32_4 = arith.constant 0 : i32
    %7 = arith.cmpi ne, %6, %c0_i32_4 : i32
    scf.if %7 {
      %c0_5 = arith.constant 0 : index
      %c0_6 = arith.constant 0 : index
      %8 = vector.load %arg4[%c0_5, %c0_6] : memref<8x32xf32, #tpu.memory_space<vmem>>, vector<8x32xf32>
      %9 = arith.maximumf %8, %1 : vector<8x32xf32>
      %c0_7 = arith.constant 0 : index
      %c0_8 = arith.constant 0 : index
      %10 = vector.load %arg4[%c0_7, %c0_8] : memref<8x32xf32, #tpu.memory_space<vmem>>, vector<8x32xf32>
      tpu.vector_store %arg4[%c0_7, %c0_8], %9 {strides = array<i32>} : memref<8x32xf32, #tpu.memory_space<vmem>>, vector<8x32xf32>,
    } else {
    }
    return
  }
  func.func @transform_0(%arg0: i32, %arg1: i32, %arg2: i32) -> (i32, i32, i32) {
    %c0_i32 = arith.constant 0 : i32
    return %arg0, %arg2, %arg1 : i32, i32, i32
  }
  func.func @transform_1(%arg0: i32, %arg1: i32, %arg2: i32) -> (i32, i32) {
    %c0_i32 = arith.constant 0 : i32
    return %arg0, %arg1 : i32, i32
  }
}

</mosaic_0001>

<llo_original>
// kernel: tpu_custom_call.1
$region0: #{tpu_custom_call.1}
  #allocation0 [shape = 'u32[]', space=smem, size = 0x4, offset = 0x4, fixed_abs, tag = 'smem constant byte address 0x4 - core index']
  #allocation1 [shape = 'u32[144,128]{1,0:T(1,128)}', space=vmem, size = 0x12000, scoped, tag = 'internal scratch']
  %s0 = inlined_call_operand.hbm [shape: f32[2,8,32], index: 0, kind: input, shape index: {}]
  %s1 = inlined_call_operand.hbm [shape: f32[2,32], index: 1, kind: output, shape index: {}]
  %s2 = sld [smem:[#allocation0]]
  $region26: #{tpu_custom_call.1} parent=0
    _
  %s4 = ssub.s32 1, %s2
  %s5 = scalar_select 0, %s4, %s2
  $region1: #{tpu_custom_call.1} parent=0
    #allocation2 [shape = 'u8[32768]{0}', space=vmem, size = 0x8000, scoped, tag = 'input window, operand 0, single buffered']
    #allocation3 [shape = 's32[1]{0}', space=sflag, size = 0x4, scoped, tag = 'scoped memory for tpu_custom_call.1']
    #allocation4 [shape = 's32[1]{0}', space=sflag, size = 0x4, scoped, tag = 'scoped memory for tpu_custom_call.1']
    #allocation5 [shape = 'u8[4096]{0}', space=vmem, size = 0x1000, scoped, tag = 'output window, operand 0, single buffered']
    %6 = vsyncpa [#allocation3], 0
    %7 = vsyncpa [#allocation4], 0
    // Predicated region
    $region2: #{tpu_custom_call.1} parent=1 // pred_check
      _
    $region3: #{tpu_custom_call.1} parent=1 // pred_check_branch
      %9 = sbr.rel (0) target = $region5
    $region4: #{tpu_custom_call.1} parent=1 // pred_region
      %s11 = ssub.s32 1024, 256
      %12 = vsyncadd [#allocation3], %s11
      %s13 = sshll.u32 [#allocation2], 4
      %s14 = int_to_ptr.vmem [resolvable:$true] %s13
      %19 = dma.hbm_to_vmem [thread:$0]  %s0, 256, %s14, [#allocation3], 128, 128, 8
    $region5: #{tpu_custom_call.1} parent=1 // pred_fallthru
      _
    // Predicated region
    $region6: #{tpu_custom_call.1} parent=1 // pred_check
      _
    $region7: #{tpu_custom_call.1} parent=1 // pred_check_branch
      %21 = sbr.rel (0) target = $region9
    $region8: #{tpu_custom_call.1} parent=1 // pred_region
      %22 = dma.done [#allocation3], 1024
    $region9: #{tpu_custom_call.1} parent=1 // pred_fallthru
      _
    %v23 = vld [vmem:[#allocation2] sm:$0xff]
    %v24 = vld [vmem:[#allocation2 + $0x8] sm:$0xff]
    %v25 = vld [vmem:[#allocation2 + $0x10] sm:$0xff]
    %v26 = vld [vmem:[#allocation2 + $0x18] sm:$0xff]
    %v27 = vld [vmem:[#allocation2 + $0x20] sm:$0xff]
    %v28 = vld [vmem:[#allocation2 + $0x28] sm:$0xff]
    %v29 = vld [vmem:[#allocation2 + $0x30] sm:$0xff]
    %v30 = vld [vmem:[#allocation2 + $0x38] sm:$0xff]
    %vm31 = vcmask 261120
    %v32 = vsel %vm31, %v23, -inf
    %v33 = vrot.slane %v32, 4
    %v34 = vmax.f32 %v32, %v33
    %v35 = vrot.slane %v34, 2
    %v36 = vmax.f32 %v34, %v35
    %v37 = vrot.slane %v36, 1
    %v38 = vmax.f32 %v36, %v37
    %v39 = vsel %vm31, %v24, -inf
    %v40 = vrot.slane %v39, 4
    %v41 = vmax.f32 %v39, %v40
    %v42 = vrot.slane %v41, 2
    %v43 = vmax.f32 %v41, %v42
    %v44 = vrot.slane %v43, 1
    %v45 = vmax.f32 %v43, %v44
    %v46 = vsel %vm31, %v25, -inf
    %v47 = vrot.slane %v46, 4
    %v48 = vmax.f32 %v46, %v47
    %v49 = vrot.slane %v48, 2
    %v50 = vmax.f32 %v48, %v49
    %v51 = vrot.slane %v50, 1
    %v52 = vmax.f32 %v50, %v51
    %v53 = vsel %vm31, %v26, -inf
    %v54 = vrot.slane %v53, 4
    %v55 = vmax.f32 %v53, %v54
    %v56 = vrot.slane %v55, 2
    %v57 = vmax.f32 %v55, %v56
    %v58 = vrot.slane %v57, 1
    %v59 = vmax.f32 %v57, %v58
    %v60 = vsel %vm31, %v27, -inf
    %v61 = vrot.slane %v60, 4
    %v62 = vmax.f32 %v60, %v61
    %v63 = vrot.slane %v62, 2
    %v64 = vmax.f32 %v62, %v63
    %v65 = vrot.slane %v64, 1
    %v66 = vmax.f32 %v64, %v65
    %v67 = vsel %vm31, %v28, -inf
    %v68 = vrot.slane %v67, 4
    %v69 = vmax.f32 %v67, %v68
    %v70 = vrot.slane %v69, 2
    %v71 = vmax.f32 %v69, %v70
    %v72 = vrot.slane %v71, 1
    %v73 = vmax.f32 %v71, %v72
    %v74 = vsel %vm31, %v29, -inf
    %v75 = vrot.slane %v74, 4
    %v76 = vmax.f32 %v74, %v75
    %v77 = vrot.slane %v76, 2
    %v78 = vmax.f32 %v76, %v77
    %v79 = vrot.slane %v78, 1
    %v80 = vmax.f32 %v78, %v79
    %v81 = vsel %vm31, %v30, -inf
    %v82 = vrot.slane %v81, 4
    %v83 = vmax.f32 %v81, %v82
    %v84 = vrot.slane %v83, 2
    %v85 = vmax.f32 %v83, %v84
    %v86 = vrot.slane %v85, 1
    %v87 = vmax.f32 %v85, %v86
    %p88 = scmp.eq.s32.totalorder 0, 0
    // Predicated region
    $region10: #{tpu_custom_call.1} parent=1 // pred_check
      %p89 = pneg %p88
    $region11: #{tpu_custom_call.1} parent=1 // pred_check_branch
      %91 = sbr.rel (%p89) target = $region13
    $region12: #{tpu_custom_call.1} parent=1 // pred_region
      %vm100 = vcmask 1041409
      %v101 = vsel %vm100, %v45, %v38
      %vm102 = vcmask 1042434
      %v103 = vsel %vm102, %v52, %v101
      %vm104 = vcmask 1043459
      %v105 = vsel %vm104, %v59, %v103
      %vm106 = vcmask 1044484
      %v107 = vsel %vm106, %v66, %v105
      %vm108 = vcmask 1045509
      %v109 = vsel %vm108, %v73, %v107
      %vm110 = vcmask 1046534
      %v111 = vsel %vm110, %v80, %v109
      %vm112 = vcmask 1047559
      %v113 = vsel %vm112, %v87, %v111
      %115 = vst.msk [vmem:[#allocation5] sm:$0xff] %vm31, %v113
    $region13: #{tpu_custom_call.1} parent=1 // pred_fallthru
      _
    %p116 = scmp.ne.s32.totalorder 0, 0
    // Predicated region
    $region14: #{tpu_custom_call.1} parent=1 // pred_check
      %p117 = pneg %p116
    $region15: #{tpu_custom_call.1} parent=1 // pred_check_branch
      %119 = sbr.rel (%p117) target = $region17
    $region16: #{tpu_custom_call.1} parent=1 // pred_region
      %v120 = vld [vmem:[#allocation5] sm:$0xff]
      %vm129 = vcmask 1041409
      %v130 = vsel %vm129, %v45, %v38
      %vm131 = vcmask 1042434
      %v132 = vsel %vm131, %v52, %v130
      %vm133 = vcmask 1043459
      %v134 = vsel %vm133, %v59, %v132
      %vm135 = vcmask 1044484
      %v136 = vsel %vm135, %v66, %v134
      %vm137 = vcmask 1045509
      %v138 = vsel %vm137, %v73, %v136
      %vm139 = vcmask 1046534
      %v140 = vsel %vm139, %v80, %v138
      %vm141 = vcmask 1047559
      %v142 = vsel %vm141, %v87, %v140
      %v144 = vmax.f32 %v120, %v142
      %145 = vst.msk [vmem:[#allocation5] sm:$0xff] %vm31, %v144
    $region17: #{tpu_custom_call.1} parent=1 // pred_fallthru
      _
    // Predicated region
    $region18: #{tpu_custom_call.1} parent=1 // pred_check
      _
    $region19: #{tpu_custom_call.1} parent=1 // pred_check_branch
      %147 = sbr.rel (0) target = $region21
    $region20: #{tpu_custom_call.1} parent=1 // pred_region
      %s149 = ssub.s32 128, 32
      %150 = vsyncadd [#allocation4], %s149
      %s151 = sshll.u32 [#allocation5], 4
      %s152 = int_to_ptr.vmem [resolvable:$true] %s151
      %157 = dma.vmem_to_hbm [thread:$0]  %s152, 32, %s1, [#allocation4], 32, 32, 2
    $region21: #{tpu_custom_call.1} parent=1 // pred_fallthru
      _
    // Predicated region
    $region22: #{tpu_custom_call.1} parent=1 // pred_check
      _
    $region23: #{tpu_custom_call.1} parent=1 // pred_check_branch
      %159 = sbr.rel (0) target = $region25
    $region24: #{tpu_custom_call.1} parent=1 // pred_region
      %160 = dma.done [#allocation4], 128
    $region25: #{tpu_custom_call.1} parent=1 // pred_fallthru
      _
    %161 = vsyncpa [#allocation3], 1
    %162 = vsyncpa [#allocation4], 1

</llo_original>
